<compile_context>
chip_gen: v5e
topology: v5e:2x2
jax: 0.10.0
libtpu: 0.0.40
codegen_flags: <defaults>
</compile_context>

<pallas_src>
import jax
import jax.numpy as jnp
from jax.experimental import pallas as pl
from jax.experimental.pallas import tpu as pltpu

Z_DIM = 32          # hparams.z_dim
H1 = 64
H2 = 256
H3 = 784            # 28 * 28
NEG_SLOPE = 0.01    # F.leaky_relu default negative_slope
MAX_TILE_B = 1024   # batch tile cap (~13 MiB/step VMEM, fits all generations)
SPLIT_B = 128       # batches >= this get >= 2 grid steps (v7x: 2 TensorCores)


def _round_up(n, m):
    return (n + m - 1) // m * m


def _leaky_relu(x):
    return jnp.where(x >= 0, x, NEG_SLOPE * x)


def generator_kernel(x_ref, w1_ref, b1_ref, w2_ref, b2_ref, w3_ref, b3_ref,
                     o_ref):
    # MXU dots take bf16 inputs and accumulate in f32; elementwise stays f32
    # (v5e's VPU/EUP are f32-only).
    x = x_ref[...].astype(jnp.bfloat16)
    h1 = jnp.dot(x, w1_ref[...],
                 preferred_element_type=jnp.float32) + b1_ref[...]
    h1 = _leaky_relu(h1)
    h2 = jnp.dot(h1.astype(jnp.bfloat16), w2_ref[...],
                 preferred_element_type=jnp.float32) + b2_ref[...]
    h2 = _leaky_relu(h2)
    h3 = jnp.dot(h2.astype(jnp.bfloat16), w3_ref[...],
                 preferred_element_type=jnp.float32) + b3_ref[...]
    o_ref[...] = jnp.tanh(h3)


@jax.jit
def basic_generator(x, w1, b1, w2, b2, w3, b3):
    B = x.shape[0]

    # Balanced batch tiling: cap tiles at MAX_TILE_B, force >= 2 tiles for
    # non-trivial batches so v7x's second TensorCore is not idle, and keep
    # padding waste to < 8 rows per tile.
    b8 = _round_up(B, 8)
    n_tiles = pl.cdiv(b8, MAX_TILE_B)
    if n_tiles < 2 and B >= SPLIT_B:
        n_tiles = 2
    tile_b = _round_up(pl.cdiv(b8, n_tiles), 8)
    b_pad = tile_b * n_tiles
    if b_pad != B:
        x = jnp.pad(x, ((0, b_pad - B), (0, 0)))

    def const_spec(shape):
        # Grid-invariant block: DMA'd once, stays VMEM-resident.
        return pl.BlockSpec(shape, lambda i: (0,) * len(shape))

    cost = pl.CostEstimate(
        flops=2 * b_pad * (Z_DIM * H1 + H1 * H2 + H2 * H3),
        transcendentals=b_pad * H3,
        bytes_accessed=(w1.size + w2.size + w3.size) * 2      # bf16 weights
        + (b1.size + b2.size + b3.size) * 4                   # f32 biases
        + b_pad * Z_DIM * 4                                   # f32 x in
        + b_pad * H3 * 4,                                     # f32 out
    )

    out_flat = pl.pallas_call(
        generator_kernel,
        out_shape=jax.ShapeDtypeStruct((b_pad, H3), jnp.float32),
        grid=(n_tiles,),
        in_specs=[
            pl.BlockSpec((tile_b, Z_DIM), lambda i: (i, 0)),   # x: tiled over B
            const_spec(w1.shape), const_spec(b1.shape),        # weights/biases
            const_spec(w2.shape), const_spec(b2.shape),        # stay resident
            const_spec(w3.shape), const_spec(b3.shape),
        ],
        out_specs=pl.BlockSpec((tile_b, H3), lambda i: (i, 0)),
        compiler_params=pltpu.CompilerParams(
            dimension_semantics=("parallel",),
            vmem_limit_bytes=48 << 20),
        cost_estimate=cost,
    )(x, w1, b1, w2, b2, w3, b3)

    # x.view(-1, 28, 28) + unsqueeze(1)  ->  (B, 1, 28, 28), NCHW.
    # When b_pad == B this is metadata-only (no copy).
    if b_pad != B:
        out_flat = out_flat[:B]
    return out_flat.reshape(B, 1, 28, 28)


def init_params(key):
    """PyTorch-style uniform fan_in init; weights stored (in, out).

    Weights are stored in bf16 (cast once here) so no per-call cast traffic;
    biases stay f32 since they are added after the f32 accumulation.
    """
    def linear(key, fan_in, fan_out):
        kw, kb = jax.random.split(key)
        bound = 1.0 / jnp.sqrt(fan_in)
        w = jax.random.uniform(kw, (fan_in, fan_out), jnp.float32, -bound, bound)
        b = jax.random.uniform(kb, (1, fan_out), jnp.float32, -bound, bound)
        return w.astype(jnp.bfloat16), b

    k1, k2, k3 = jax.random.split(key, 3)
    w1, b1 = linear(k1, Z_DIM, H1)
    w2, b2 = linear(k2, H1, H2)
    w3, b3 = linear(k3, H2, H3)
    return w1, b1, w2, b2, w3, b3


if __name__ == "__main__":
    key = jax.random.PRNGKey(0)
    k_params, k_x = jax.random.split(key)
    w1, b1, w2, b2, w3, b3 = init_params(k_params)

    B = 2
    x = jax.random.normal(k_x, (B, Z_DIM), jnp.float32)

    out = basic_generator(x, w1, b1, w2, b2, w3, b3)
    out = jax.block_until_ready(out)

    assert out.shape == (B, 1, 28, 28), out.shape
    assert out.dtype == jnp.float32

    # Reference in plain JAX, mirroring the kernel's bf16 dot inputs with f32
    # accumulation so tolerances stay tight.
    def ref(x):
        h = jnp.dot(x.astype(jnp.bfloat16), w1,
                    preferred_element_type=jnp.float32) + b1
        h = jnp.where(h >= 0, h, NEG_SLOPE * h)
        h = jnp.dot(h.astype(jnp.bfloat16), w2,
                    preferred_element_type=jnp.float32) + b2
        h = jnp.where(h >= 0, h, NEG_SLOPE * h)
        h = jnp.tanh(jnp.dot(h.astype(jnp.bfloat16), w3,
                             preferred_element_type=jnp.float32) + b3)
        return h.reshape(-1, 1, 28, 28)

    ref_out = ref(x)
    assert jnp.allclose(out, ref_out, atol=2e-3, rtol=2e-3), (
        float(jnp.max(jnp.abs(out - ref_out))))

    print("KERNEL_OK")
</pallas_src>

<mosaic_0001>
module attributes {stable_mosaic.version = 11 : i64} {
  func.func @generator_kernel(%arg0: i32, %arg1: memref<8x32xf32, #tpu.memory_space<vmem>>, %arg2: memref<32x64xbf16, #tpu.memory_space<vmem>>, %arg3: memref<1x64xf32, #tpu.memory_space<vmem>>, %arg4: memref<64x256xbf16, #tpu.memory_space<vmem>>, %arg5: memref<1x256xf32, #tpu.memory_space<vmem>>, %arg6: memref<256x784xbf16, #tpu.memory_space<vmem>>, %arg7: memref<1x784xf32, #tpu.memory_space<vmem>>, %arg8: memref<8x784xf32, #tpu.memory_space<vmem>>) attributes {dimension_semantics = [#tpu.dimension_semantics<parallel>], iteration_bounds = array<i64: 1>, scalar_prefetch = 0 : i64, scratch_operands = 0 : i64, tpu.core_type = #tpu.core_type<tc>, window_params = [{transform_indices = @transform_0, window_bounds = array<i64: 8, 32>}, {pipeline_mode = #tpu.pipeline_mode<synchronous>, transform_indices = @transform_1, window_bounds = array<i64: 32, 64>}, {pipeline_mode = #tpu.pipeline_mode<synchronous>, transform_indices = @transform_2, window_bounds = array<i64: 1, 64>}, {pipeline_mode = #tpu.pipeline_mode<synchronous>, transform_indices = @transform_3, window_bounds = array<i64: 64, 256>}, {pipeline_mode = #tpu.pipeline_mode<synchronous>, transform_indices = @transform_4, window_bounds = array<i64: 1, 256>}, {pipeline_mode = #tpu.pipeline_mode<synchronous>, transform_indices = @transform_5, window_bounds = array<i64: 256, 784>}, {pipeline_mode = #tpu.pipeline_mode<synchronous>, transform_indices = @transform_6, window_bounds = array<i64: 1, 784>}, {transform_indices = @transform_7, window_bounds = array<i64: 8, 784>}]} {
    %c0 = arith.constant 0 : index
    %c0_0 = arith.constant 0 : index
    %0 = vector.load %arg1[%c0, %c0_0] : memref<8x32xf32, #tpu.memory_space<vmem>>, vector<8x32xf32>
    %1 = arith.truncf %0 : vector<8x32xf32> to vector<8x32xbf16>
    %c0_1 = arith.constant 0 : index
    %c0_2 = arith.constant 0 : index
    %2 = vector.load %arg2[%c0_1, %c0_2] : memref<32x64xbf16, #tpu.memory_space<vmem>>, vector<32x64xbf16>
    %cst = arith.constant dense<0.000000e+00> : vector<8x64xf32>
    %3 = tpu.matmul %1, %2, %cst {dimension_numbers = #tpu.dot_dimension_numbers<[1], [0], [0], [1], [0, 0, 1, 1], [], []>} : vector<8x32xbf16>, vector<32x64xbf16>, vector<8x64xf32> -> vector<8x64xf32>
    %c0_3 = arith.constant 0 : index
    %c0_4 = arith.constant 0 : index
    %4 = vector.load %arg3[%c0_3, %c0_4] : memref<1x64xf32, #tpu.memory_space<vmem>>, vector<1x64xf32>
    %5 = vector.broadcast %4 : vector<1x64xf32> to vector<8x64xf32>
    %6 = arith.addf %3, %5 : vector<8x64xf32>
    %cst_5 = arith.constant 0.000000e+00 : f32
    %7 = vector.broadcast %cst_5 : f32 to vector<8x64xf32>
    %8 = arith.cmpf oge, %6, %7 : vector<8x64xf32>
    %cst_6 = arith.constant 0.00999999977 : f32
    %9 = vector.broadcast %cst_6 : f32 to vector<8x64xf32>
    %10 = arith.mulf %9, %6 : vector<8x64xf32>
    %11 = arith.select %8, %6, %10 : vector<8x64xi1>, vector<8x64xf32>
    %12 = arith.truncf %11 : vector<8x64xf32> to vector<8x64xbf16>
    %c0_7 = arith.constant 0 : index
    %c0_8 = arith.constant 0 : index
    %13 = vector.load %arg4[%c0_7, %c0_8] : memref<64x256xbf16, #tpu.memory_space<vmem>>, vector<64x256xbf16>
    %cst_9 = arith.constant dense<0.000000e+00> : vector<8x256xf32>
    %14 = tpu.matmul %12, %13, %cst_9 {dimension_numbers = #tpu.dot_dimension_numbers<[1], [0], [0], [1], [0, 0, 1, 1], [], []>} : vector<8x64xbf16>, vector<64x256xbf16>, vector<8x256xf32> -> vector<8x256xf32>
    %c0_10 = arith.constant 0 : index
    %c0_11 = arith.constant 0 : index
    %15 = vector.load %arg5[%c0_10, %c0_11] : memref<1x256xf32, #tpu.memory_space<vmem>>, vector<1x256xf32>
    %16 = vector.broadcast %15 : vector<1x256xf32> to vector<8x256xf32>
    %17 = arith.addf %14, %16 : vector<8x256xf32>
    %cst_12 = arith.constant 0.000000e+00 : f32
    %18 = vector.broadcast %cst_12 : f32 to vector<8x256xf32>
    %19 = arith.cmpf oge, %17, %18 : vector<8x256xf32>
    %cst_13 = arith.constant 0.00999999977 : f32
    %20 = vector.broadcast %cst_13 : f32 to vector<8x256xf32>
    %21 = arith.mulf %20, %17 : vector<8x256xf32>
    %22 = arith.select %19, %17, %21 : vector<8x256xi1>, vector<8x256xf32>
    %23 = arith.truncf %22 : vector<8x256xf32> to vector<8x256xbf16>
    %c0_14 = arith.constant 0 : index
    %c0_15 = arith.constant 0 : index
    %24 = vector.load %arg6[%c0_14, %c0_15] : memref<256x784xbf16, #tpu.memory_space<vmem>>, vector<256x784xbf16>
    %cst_16 = arith.constant dense<0.000000e+00> : vector<8x784xf32>
    %25 = tpu.matmul %23, %24, %cst_16 {dimension_numbers = #tpu.dot_dimension_numbers<[1], [0], [0], [1], [0, 0, 1, 1], [], []>} : vector<8x256xbf16>, vector<256x784xbf16>, vector<8x784xf32> -> vector<8x784xf32>
    %c0_17 = arith.constant 0 : index
    %c0_18 = arith.constant 0 : index
    %26 = vector.load %arg7[%c0_17, %c0_18] : memref<1x784xf32, #tpu.memory_space<vmem>>, vector<1x784xf32>
    %27 = vector.broadcast %26 : vector<1x784xf32> to vector<8x784xf32>
    %28 = arith.addf %25, %27 : vector<8x784xf32>
    %29 = math.tanh %28 : vector<8x784xf32>
    %c0_19 = arith.constant 0 : index
    %c0_20 = arith.constant 0 : index
    %30 = vector.load %arg8[%c0_19, %c0_20] : memref<8x784xf32, #tpu.memory_space<vmem>>, vector<8x784xf32>
    tpu.vector_store %arg8[%c0_19, %c0_20], %29 {strides = array<i32>} : memref<8x784xf32, #tpu.memory_space<vmem>>, vector<8x784xf32>,
    return
  }
  func.func @transform_0(%arg0: i32) -> (i32, i32) {
    %c0_i32 = arith.constant 0 : i32
    %c0_i32_0 = arith.constant 0 : i32
    return %arg0, %c0_i32 : i32, i32
  }
  func.func @transform_1(%arg0: i32) -> (i32, i32) {
    %c0_i32 = arith.constant 0 : i32
    %c0_i32_0 = arith.constant 0 : i32
    %c0_i32_1 = arith.constant 0 : i32
    return %c0_i32, %c0_i32_0 : i32, i32
  }
  func.func @transform_2(%arg0: i32) -> (i32, i32) {
    %c0_i32 = arith.constant 0 : i32
    %c0_i32_0 = arith.constant 0 : i32
    %c0_i32_1 = arith.constant 0 : i32
    return %c0_i32, %c0_i32_0 : i32, i32
  }
  func.func @transform_3(%arg0: i32) -> (i32, i32) {
    %c0_i32 = arith.constant 0 : i32
    %c0_i32_0 = arith.constant 0 : i32
    %c0_i32_1 = arith.constant 0 : i32
    return %c0_i32, %c0_i32_0 : i32, i32
  }
  func.func @transform_4(%arg0: i32) -> (i32, i32) {
    %c0_i32 = arith.constant 0 : i32
    %c0_i32_0 = arith.constant 0 : i32
    %c0_i32_1 = arith.constant 0 : i32
    return %c0_i32, %c0_i32_0 : i32, i32
  }
  func.func @transform_5(%arg0: i32) -> (i32, i32) {
    %c0_i32 = arith.constant 0 : i32
    %c0_i32_0 = arith.constant 0 : i32
    %c0_i32_1 = arith.constant 0 : i32
    return %c0_i32, %c0_i32_0 : i32, i32
  }
  func.func @transform_6(%arg0: i32) -> (i32, i32) {
    %c0_i32 = arith.constant 0 : i32
    %c0_i32_0 = arith.constant 0 : i32
    %c0_i32_1 = arith.constant 0 : i32
    return %c0_i32, %c0_i32_0 : i32, i32
  }
  func.func @transform_7(%arg0: i32) -> (i32, i32) {
    %c0_i32 = arith.constant 0 : i32
    %c0_i32_0 = arith.constant 0 : i32
    return %arg0, %c0_i32 : i32, i32
  }
}

</mosaic_0001>

<llo_original>
// kernel: basic_generator.1
$region0: #{basic_generator.1}
  #allocation0 [shape = 'u32[]', space=smem, size = 0x4, offset = 0x4, fixed_abs, tag = 'smem constant byte address 0x4 - core index']
  #allocation1 [shape = 'u32[72,128]{1,0:T(1,128)}', space=vmem, size = 0x9000, scoped, tag = 'internal scratch']
  %s0 = inlined_call_operand.vmem [shape: f32[8,32], index: 0, kind: input, shape index: {}]
  %s1 = inlined_call_operand.vmem [shape: bf16[32,64], index: 1, kind: input, shape index: {}]
  %s2 = inlined_call_operand.vmem [shape: f32[1,64], index: 2, kind: input, shape index: {}]
  %s3 = inlined_call_operand.vmem [shape: bf16[64,256], index: 3, kind: input, shape index: {}]
  %s4 = inlined_call_operand.vmem [shape: f32[1,256], index: 4, kind: input, shape index: {}]
  %s5 = inlined_call_operand.vmem [shape: bf16[256,784], index: 5, kind: input, shape index: {}]
  %s6 = inlined_call_operand.vmem [shape: f32[1,784], index: 6, kind: input, shape index: {}]
  %s7 = inlined_call_operand.vmem [shape: f32[8,784], index: 7, kind: output, shape index: {}]
  %s8 = sld [smem:[#allocation0]]
  $region38: #{basic_generator.1} parent=0
    _
  %s10 = ssub.s32 1, %s8
  %s11 = scalar_select 0, %s10, %s8
  // Predicated region
  $region2: #{basic_generator.1} parent=0 // pred_check
    _
  $region3: #{basic_generator.1} parent=0 // pred_check_branch
    %13 = sbr.rel (0) target = $region5
  $region4: #{basic_generator.1} parent=0 // pred_region
    _
  $region5: #{basic_generator.1} parent=0 // pred_fallthru
    _
  // Predicated region
  $region6: #{basic_generator.1} parent=0 // pred_check
    _
  $region7: #{basic_generator.1} parent=0 // pred_check_branch
    %15 = sbr.rel (0) target = $region9
  $region8: #{basic_generator.1} parent=0 // pred_region
    _
  $region9: #{basic_generator.1} parent=0 // pred_fallthru
    _
  // Predicated region
  $region10: #{basic_generator.1} parent=0 // pred_check
    _
  $region11: #{basic_generator.1} parent=0 // pred_check_branch
    %17 = sbr.rel (0) target = $region13
  $region12: #{basic_generator.1} parent=0 // pred_region
    _
  $region13: #{basic_generator.1} parent=0 // pred_fallthru
    _
  // Predicated region
  $region14: #{basic_generator.1} parent=0 // pred_check
    _
  $region15: #{basic_generator.1} parent=0 // pred_check_branch
    %19 = sbr.rel (0) target = $region17
  $region16: #{basic_generator.1} parent=0 // pred_region
    _
  $region17: #{basic_generator.1} parent=0 // pred_fallthru
    _
  // Predicated region
  $region18: #{basic_generator.1} parent=0 // pred_check
    _
  $region19: #{basic_generator.1} parent=0 // pred_check_branch
    %21 = sbr.rel (0) target = $region21
  $region20: #{basic_generator.1} parent=0 // pred_region
    _
  $region21: #{basic_generator.1} parent=0 // pred_fallthru
    _
  // Predicated region
  $region22: #{basic_generator.1} parent=0 // pred_check
    _
  $region23: #{basic_generator.1} parent=0 // pred_check_branch
    %23 = sbr.rel (0) target = $region25
  $region24: #{basic_generator.1} parent=0 // pred_region
    _
  $region25: #{basic_generator.1} parent=0 // pred_fallthru
    _
  // Predicated region
  $region26: #{basic_generator.1} parent=0 // pred_check
    _
  $region27: #{basic_generator.1} parent=0 // pred_check_branch
    %25 = sbr.rel (0) target = $region29
  $region28: #{basic_generator.1} parent=0 // pred_region
    _
  $region29: #{basic_generator.1} parent=0 // pred_fallthru
    _
  %v27 = vld [vmem:[%s0] sm:$0xff]
  %v28 = vpack.c.bf16 %v27, %v27
  %v29 = vld [vmem:[%s1] sm:$0xf]
  %v30 = vld [vmem:[%s1 + $0x4] sm:$0xf]
  %v31 = vld [vmem:[%s1 + $0x8] sm:$0xf]
  %v32 = vld [vmem:[%s1 + $0xc] sm:$0xf]
  %v33 = vld [vmem:[%s2] sm:$0x1]
  %v35 = vperm.slane %v33, 0
  %v41 = vunpack.c.l.b16 %v29
  %v42 = vunpack.c.l.b16 %v30
  %v43 = vunpack.c.l.b16 %v31
  %v44 = vunpack.c.l.b16 %v32
  %v45 = vpack.c.b16 %v42, %v41
  %v46 = vpack.c.b16 %v44, %v43
  %vm49 = vcmask 261120
  %v51 = vsel %vm49, %v28, 0
  %53 = vmatpush.bf16.msra.mxu0 0
  %54 = vmatpush.bf16.msra.mxu0 0
  %55 = vmatpush.bf16.msra.mxu0 0
  %56 = vmatpush.bf16.msra.mxu0 0
  %57 = vmatpush.bf16.msra.mxu0 0
  %58 = vmatpush.bf16.msra.mxu0 0
  %59 = vmatpush.bf16.msra.mxu0 %v46
  %60 = vmatpush.bf16.msra.mxu0 %v45
  %61 = vmatmul.bf16.gmra.mxu0 %v51
  %v62 = vpop.f32.mrf.mxu0
  %v63 = vadd.f32 %v35, %v62
  %v64 = vpop.f32.mrf.mxu0
  %65 = vdwg.mxu0
  %vm66 = vcmp.ge.f32.partialorder %v63, 0.0
  %v67 = vmul.f32 %v63, 0.01
  %v68 = vsel %vm66, %v63, %v67
  %v69 = vpack.c.bf16 %v68, %v68
  %v70 = vld [vmem:[%s3] sm:$0xff]
  %v71 = vld [vmem:[%s3 + $0x8] sm:$0xff]
  %v72 = vld [vmem:[%s3 + $0x10] sm:$0xff]
  %v73 = vld [vmem:[%s3 + $0x18] sm:$0xff]
  %v74 = vld [vmem:[%s3 + $0x20] sm:$0xff]
  %v75 = vld [vmem:[%s3 + $0x28] sm:$0xff]
  %v76 = vld [vmem:[%s3 + $0x30] sm:$0xff]
  %v77 = vld [vmem:[%s3 + $0x38] sm:$0xff]
  %v78 = vld [vmem:[%s4] sm:$0x3]
  %v80 = vperm.slane %v78, 0
  %v81 = vperm.slane %v78, 1
  %v92 = vunpack.c.l.b16 %v70
  %v93 = vunpack.c.h.b16 %v70
  %v94 = vunpack.c.l.b16 %v71
  %v95 = vunpack.c.h.b16 %v71
  %v96 = vunpack.c.l.b16 %v72
  %v97 = vunpack.c.h.b16 %v72
  %v98 = vunpack.c.l.b16 %v73
  %v99 = vunpack.c.h.b16 %v73
  %v100 = vunpack.c.l.b16 %v74
  %v101 = vunpack.c.h.b16 %v74
  %v102 = vunpack.c.l.b16 %v75
  %v103 = vunpack.c.h.b16 %v75
  %v104 = vunpack.c.l.b16 %v76
  %v105 = vunpack.c.h.b16 %v76
  %v106 = vunpack.c.l.b16 %v77
  %v107 = vunpack.c.h.b16 %v77
  %v108 = vpack.c.b16 %v94, %v92
  %v109 = vpack.c.b16 %v95, %v93
  %v110 = vpack.c.b16 %v98, %v96
  %v111 = vpack.c.b16 %v99, %v97
  %v112 = vpack.c.b16 %v102, %v100
  %v113 = vpack.c.b16 %v103, %v101
  %v114 = vpack.c.b16 %v106, %v104
  %v115 = vpack.c.b16 %v107, %v105
  %vm124 = vcmask 523264
  %v126 = vsel %vm124, %v69, 0
  %128 = vmatpush.bf16.msra.mxu0 0
  %129 = vmatpush.bf16.msra.mxu0 0
  %130 = vmatpush.bf16.msra.mxu0 0
  %131 = vmatpush.bf16.msra.mxu0 0
  %132 = vmatpush.bf16.msra.mxu0 %v114
  %133 = vmatpush.bf16.msra.mxu0 %v112
  %134 = vmatpush.bf16.msra.mxu0 %v110
  %135 = vmatpush.bf16.msra.mxu0 %v108
  %136 = vmatmul.bf16.gmra.mxu0 %v126
  %v137 = vpop.f32.mrf.mxu0
  %v138 = vadd.f32 %v80, %v137
  %v139 = vpop.f32.mrf.mxu0
  %140 = vdwg.mxu0
  %141 = vmatpush.bf16.msra.mxu0 0
  %142 = vmatpush.bf16.msra.mxu0 0
  %143 = vmatpush.bf16.msra.mxu0 0
  %144 = vmatpush.bf16.msra.mxu0 0
  %145 = vmatpush.bf16.msra.mxu0 %v115
  %146 = vmatpush.bf16.msra.mxu0 %v113
  %147 = vmatpush.bf16.msra.mxu0 %v111
  %148 = vmatpush.bf16.msra.mxu0 %v109
  %149 = vmatmul.bf16.gmra.mxu0 %v126
  %v150 = vpop.f32.mrf.mxu0
  %v151 = vadd.f32 %v81, %v150
  %v152 = vpop.f32.mrf.mxu0
  %153 = vdwg.mxu0
  %vm154 = vcmp.ge.f32.partialorder %v138, 0.0
  %vm155 = vcmp.ge.f32.partialorder %v151, 0.0
  %v156 = vmul.f32 %v138, 0.01
  %v157 = vmul.f32 %v151, 0.01
  %v158 = vsel %vm154, %v138, %v156
  %v159 = vsel %vm155, %v151, %v157
  %v160 = vpack.c.bf16 %v158, %v158
  %v161 = vpack.c.bf16 %v159, %v159
  %v162 = vld [vmem:[%s5] sm:$0xff]
  %v163 = vld [vmem:[%s5 + $0x8] sm:$0xff]
  %v164 = vld [vmem:[%s5 + $0x10] sm:$0xff]
  %v165 = vld [vmem:[%s5 + $0x18] sm:$0xf]
  %v166 = vld [vmem:[%s5 + $0x1c] sm:$0xff]
  %v167 = vld [vmem:[%s5 + $0x24] sm:$0xff]
  %v168 = vld [vmem:[%s5 + $0x2c] sm:$0xff]
  %v169 = vld [vmem:[%s5 + $0x34] sm:$0xf]
  %v170 = vld [vmem:[%s5 + $0x38] sm:$0xff]
  %v171 = vld [vmem:[%s5 + $0x40] sm:$0xff]
  %v172 = vld [vmem:[%s5 + $0x48] sm:$0xff]
  %v173 = vld [vmem:[%s5 + $0x50] sm:$0xf]
  %v174 = vld [vmem:[%s5 + $0x54] sm:$0xff]
  %v175 = vld [vmem:[%s5 + $0x5c] sm:$0xff]
  %v176 = vld [vmem:[%s5 + $0x64] sm:$0xff]
  %v177 = vld [vmem:[%s5 + $0x6c] sm:$0xf]
  %v178 = vld [vmem:[%s5 + $0x70] sm:$0xff]
  %v179 = vld [vmem:[%s5 + $0x78] sm:$0xff]
  %v180 = vld [vmem:[%s5 + $0x80] sm:$0xff]
  %v181 = vld [vmem:[%s5 + $0x88] sm:$0xf]
  %v182 = vld [vmem:[%s5 + $0x8c] sm:$0xff]
  %v183 = vld [vmem:[%s5 + $0x94] sm:$0xff]
  %v184 = vld [vmem:[%s5 + $0x9c] sm:$0xff]
  %v185 = vld [vmem:[%s5 + $0xa4] sm:$0xf]
  %v186 = vld [vmem:[%s5 + $0xa8] sm:$0xff]
  %v187 = vld [vmem:[%s5 + $0xb0] sm:$0xff]
  %v188 = vld [vmem:[%s5 + $0xb8] sm:$0xff]
  %v189 = vld [vmem:[%s5 + $0xc0] sm:$0xf]
  %v190 = vld [vmem:[%s5 + $0xc4] sm:$0xff]
  %v191 = vld [vmem:[%s5 + $0xcc] sm:$0xff]
  %v192 = vld [vmem:[%s5 + $0xd4] sm:$0xff]
  %v193 = vld [vmem:[%s5 + $0xdc] sm:$0xf]
  %v194 = vld [vmem:[%s5 + $0xe0] sm:$0xff]
  %v195 = vld [vmem:[%s5 + $0xe8] sm:$0xff]
  %v196 = vld [vmem:[%s5 + $0xf0] sm:$0xff]
  %v197 = vld [vmem:[%s5 + $0xf8] sm:$0xf]
  %v198 = vld [vmem:[%s5 + $0xfc] sm:$0xff]
  %v199 = vld [vmem:[%s5 + $0x104] sm:$0xff]
  %v200 = vld [vmem:[%s5 + $0x10c] sm:$0xff]
  %v201 = vld [vmem:[%s5 + $0x114] sm:$0xf]
  %v202 = vld [vmem:[%s5 + $0x118] sm:$0xff]
  %v203 = vld [vmem:[%s5 + $0x120] sm:$0xff]
  %v204 = vld [vmem:[%s5 + $0x128] sm:$0xff]
  %v205 = vld [vmem:[%s5 + $0x130] sm:$0xf]
  %v206 = vld [vmem:[%s5 + $0x134] sm:$0xff]
  %v207 = vld [vmem:[%s5 + $0x13c] sm:$0xff]
  %v208 = vld [vmem:[%s5 + $0x144] sm:$0xff]
  %v209 = vld [vmem:[%s5 + $0x14c] sm:$0xf]
  %v210 = vld [vmem:[%s5 + $0x150] sm:$0xff]
  %v211 = vld [vmem:[%s5 + $0x158] sm:$0xff]
  %v212 = vld [vmem:[%s5 + $0x160] sm:$0xff]
  %v213 = vld [vmem:[%s5 + $0x168] sm:$0xf]
  %v214 = vld [vmem:[%s5 + $0x16c] sm:$0xff]
  %v215 = vld [vmem:[%s5 + $0x174] sm:$0xff]
  %v216 = vld [vmem:[%s5 + $0x17c] sm:$0xff]
  %v217 = vld [vmem:[%s5 + $0x184] sm:$0xf]
  %v218 = vld [vmem:[%s5 + $0x188] sm:$0xff]
  %v219 = vld [vmem:[%s5 + $0x190] sm:$0xff]
  %v220 = vld [vmem:[%s5 + $0x198] sm:$0xff]
  %v221 = vld [vmem:[%s5 + $0x1a0] sm:$0xf]
  %v222 = vld [vmem:[%s5 + $0x1a4] sm:$0xff]
  %v223 = vld [vmem:[%s5 + $0x1ac] sm:$0xff]
  %v224 = vld [vmem:[%s5 + $0x1b4] sm:$0xff]
  %v225 = vld [vmem:[%s5 + $0x1bc] sm:$0xf]
  %v226 = vld [vmem:[%s5 + $0x1c0] sm:$0xff]
  %v227 = vld [vmem:[%s5 + $0x1c8] sm:$0xff]
  %v228 = vld [vmem:[%s5 + $0x1d0] sm:$0xff]
  %v229 = vld [vmem:[%s5 + $0x1d8] sm:$0xf]
  %v230 = vld [vmem:[%s5 + $0x1dc] sm:$0xff]
  %v231 = vld [vmem:[%s5 + $0x1e4] sm:$0xff]
  %v232 = vld [vmem:[%s5 + $0x1ec] sm:$0xff]
  %v233 = vld [vmem:[%s5 + $0x1f4] sm:$0xf]
  %v234 = vld [vmem:[%s5 + $0x1f8] sm:$0xff]
  %v235 = vld [vmem:[%s5 + $0x200] sm:$0xff]
  %v236 = vld [vmem:[%s5 + $0x208] sm:$0xff]
  %v237 = vld [vmem:[%s5 + $0x210] sm:$0xf]
  %v238 = vld [vmem:[%s5 + $0x214] sm:$0xff]
  %v239 = vld [vmem:[%s5 + $0x21c] sm:$0xff]
  %v240 = vld [vmem:[%s5 + $0x224] sm:$0xff]
  %v241 = vld [vmem:[%s5 + $0x22c] sm:$0xf]
  %v242 = vld [vmem:[%s5 + $0x230] sm:$0xff]
  %v243 = vld [vmem:[%s5 + $0x238] sm:$0xff]
  %v244 = vld [vmem:[%s5 + $0x240] sm:$0xff]
  %v245 = vld [vmem:[%s5 + $0x248] sm:$0xf]
  %v246 = vld [vmem:[%s5 + $0x24c] sm:$0xff]
  %v247 = vld [vmem:[%s5 + $0x254] sm:$0xff]
  %v248 = vld [vmem:[%s5 + $0x25c] sm:$0xff]
  %v249 = vld [vmem:[%s5 + $0x264] sm:$0xf]
  %v250 = vld [vmem:[%s5 + $0x268] sm:$0xff]
  %v251 = vld [vmem:[%s5 + $0x270] sm:$0xff]
  %v252 = vld [vmem:[%s5 + $0x278] sm:$0xff]
  %v253 = vld [vmem:[%s5 + $0x280] sm:$0xf]
  %v254 = vld [vmem:[%s5 + $0x284] sm:$0xff]
  %v255 = vld [vmem:[%s5 + $0x28c] sm:$0xff]
  %v256 = vld [vmem:[%s5 + $0x294] sm:$0xff]
  %v257 = vld [vmem:[%s5 + $0x29c] sm:$0xf]
  %v258 = vld [vmem:[%s5 + $0x2a0] sm:$0xff]
  %v259 = vld [vmem:[%s5 + $0x2a8] sm:$0xff]
  %v260 = vld [vmem:[%s5 + $0x2b0] sm:$0xff]
  %v261 = vld [vmem:[%s5 + $0x2b8] sm:$0xf]
  %v262 = vld [vmem:[%s5 + $0x2bc] sm:$0xff]
  %v263 = vld [vmem:[%s5 + $0x2c4] sm:$0xff]
  %v264 = vld [vmem:[%s5 + $0x2cc] sm:$0xff]
  %v265 = vld [vmem:[%s5 + $0x2d4] sm:$0xf]
  %v266 = vld [vmem:[%s5 + $0x2d8] sm:$0xff]
  %v267 = vld [vmem:[%s5 + $0x2e0] sm:$0xff]
  %v268 = vld [vmem:[%s5 + $0x2e8] sm:$0xff]
  %v269 = vld [vmem:[%s5 + $0x2f0] sm:$0xf]
  %v270 = vld [vmem:[%s5 + $0x2f4] sm:$0xff]
  %v271 = vld [vmem:[%s5 + $0x2fc] sm:$0xff]
  %v272 = vld [vmem:[%s5 + $0x304] sm:$0xff]
  %v273 = vld [vmem:[%s5 + $0x30c] sm:$0xf]
  %v274 = vld [vmem:[%s5 + $0x310] sm:$0xff]
  %v275 = vld [vmem:[%s5 + $0x318] sm:$0xff]
  %v276 = vld [vmem:[%s5 + $0x320] sm:$0xff]
  %v277 = vld [vmem:[%s5 + $0x328] sm:$0xf]
  %v278 = vld [vmem:[%s5 + $0x32c] sm:$0xff]
  %v279 = vld [vmem:[%s5 + $0x334] sm:$0xff]
  %v280 = vld [vmem:[%s5 + $0x33c] sm:$0xff]
  %v281 = vld [vmem:[%s5 + $0x344] sm:$0xf]
  %v282 = vld [vmem:[%s5 + $0x348] sm:$0xff]
  %v283 = vld [vmem:[%s5 + $0x350] sm:$0xff]
  %v284 = vld [vmem:[%s5 + $0x358] sm:$0xff]
  %v285 = vld [vmem:[%s5 + $0x360] sm:$0xf]
  %v286 = vld [vmem:[%s5 + $0x364] sm:$0xff]
  %v287 = vld [vmem:[%s5 + $0x36c] sm:$0xff]
  %v288 = vld [vmem:[%s5 + $0x374] sm:$0xff]
  %v289 = vld [vmem:[%s5 + $0x37c] sm:$0xf]
  %v290 = vld [vmem:[%s6] sm:$0x7f]
  %v292 = vperm.slane %v290, 0
  %v293 = vperm.slane %v290, 1
  %v294 = vperm.slane %v290, 2
  %v295 = vperm.slane %v290, 3
  %v296 = vperm.slane %v290, 4
  %v297 = vperm.slane %v290, 5
  %v298 = vperm.slane %v290, 6
  %v434 = vunpack.c.l.b16 %v162
  %v435 = vunpack.c.h.b16 %v162
  %v436 = vunpack.c.l.b16 %v163
  %v437 = vunpack.c.h.b16 %v163
  %v438 = vunpack.c.l.b16 %v164
  %v439 = vunpack.c.h.b16 %v164
  %v440 = vunpack.c.l.b16 %v165
  %v441 = vunpack.c.l.b16 %v166
  %v442 = vunpack.c.h.b16 %v166
  %v443 = vunpack.c.l.b16 %v167
  %v444 = vunpack.c.h.b16 %v167
  %v445 = vunpack.c.l.b16 %v168
  %v446 = vunpack.c.h.b16 %v168
  %v447 = vunpack.c.l.b16 %v169
  %v448 = vunpack.c.l.b16 %v170
  %v449 = vunpack.c.h.b16 %v170
  %v450 = vunpack.c.l.b16 %v171
  %v451 = vunpack.c.h.b16 %v171
  %v452 = vunpack.c.l.b16 %v172
  %v453 = vunpack.c.h.b16 %v172
  %v454 = vunpack.c.l.b16 %v173
  %v455 = vunpack.c.l.b16 %v174
  %v456 = vunpack.c.h.b16 %v174
  %v457 = vunpack.c.l.b16 %v175
  %v458 = vunpack.c.h.b16 %v175
  %v459 = vunpack.c.l.b16 %v176
  %v460 = vunpack.c.h.b16 %v176
  %v461 = vunpack.c.l.b16 %v177
  %v462 = vunpack.c.l.b16 %v178
  %v463 = vunpack.c.h.b16 %v178
  %v464 = vunpack.c.l.b16 %v179
  %v465 = vunpack.c.h.b16 %v179
  %v466 = vunpack.c.l.b16 %v180
  %v467 = vunpack.c.h.b16 %v180
  %v468 = vunpack.c.l.b16 %v181
  %v469 = vunpack.c.l.b16 %v182
  %v470 = vunpack.c.h.b16 %v182
  %v471 = vunpack.c.l.b16 %v183
  %v472 = vunpack.c.h.b16 %v183
  %v473 = vunpack.c.l.b16 %v184
  %v474 = vunpack.c.h.b16 %v184
  %v475 = vunpack.c.l.b16 %v185
  %v476 = vunpack.c.l.b16 %v186
  %v477 = vunpack.c.h.b16 %v186
  %v478 = vunpack.c.l.b16 %v187
  %v479 = vunpack.c.h.b16 %v187
  %v480 = vunpack.c.l.b16 %v188
  %v481 = vunpack.c.h.b16 %v188
  %v482 = vunpack.c.l.b16 %v189
  %v483 = vunpack.c.l.b16 %v190
  %v484 = vunpack.c.h.b16 %v190
  %v485 = vunpack.c.l.b16 %v191
  %v486 = vunpack.c.h.b16 %v191
  %v487 = vunpack.c.l.b16 %v192
  %v488 = vunpack.c.h.b16 %v192
  %v489 = vunpack.c.l.b16 %v193
  %v490 = vunpack.c.l.b16 %v194
  %v491 = vunpack.c.h.b16 %v194
  %v492 = vunpack.c.l.b16 %v195
  %v493 = vunpack.c.h.b16 %v195
  %v494 = vunpack.c.l.b16 %v196
  %v495 = vunpack.c.h.b16 %v196
  %v496 = vunpack.c.l.b16 %v197
  %v497 = vunpack.c.l.b16 %v198
  %v498 = vunpack.c.h.b16 %v198
  %v499 = vunpack.c.l.b16 %v199
  %v500 = vunpack.c.h.b16 %v199
  %v501 = vunpack.c.l.b16 %v200
  %v502 = vunpack.c.h.b16 %v200
  %v503 = vunpack.c.l.b16 %v201
  %v504 = vunpack.c.l.b16 %v202
  %v505 = vunpack.c.h.b16 %v202
  %v506 = vunpack.c.l.b16 %v203
  %v507 = vunpack.c.h.b16 %v203
  %v508 = vunpack.c.l.b16 %v204
  %v509 = vunpack.c.h.b16 %v204
  %v510 = vunpack.c.l.b16 %v205
  %v511 = vunpack.c.l.b16 %v206
  %v512 = vunpack.c.h.b16 %v206
  %v513 = vunpack.c.l.b16 %v207
  %v514 = vunpack.c.h.b16 %v207
  %v515 = vunpack.c.l.b16 %v208
  %v516 = vunpack.c.h.b16 %v208
  %v517 = vunpack.c.l.b16 %v209
  %v518 = vunpack.c.l.b16 %v210
  %v519 = vunpack.c.h.b16 %v210
  %v520 = vunpack.c.l.b16 %v211
  %v521 = vunpack.c.h.b16 %v211
  %v522 = vunpack.c.l.b16 %v212
  %v523 = vunpack.c.h.b16 %v212
  %v524 = vunpack.c.l.b16 %v213
  %v525 = vunpack.c.l.b16 %v214
  %v526 = vunpack.c.h.b16 %v214
  %v527 = vunpack.c.l.b16 %v215
  %v528 = vunpack.c.h.b16 %v215
  %v529 = vunpack.c.l.b16 %v216
  %v530 = vunpack.c.h.b16 %v216
  %v531 = vunpack.c.l.b16 %v217
  %v532 = vunpack.c.l.b16 %v218
  %v533 = vunpack.c.h.b16 %v218
  %v534 = vunpack.c.l.b16 %v219
  %v535 = vunpack.c.h.b16 %v219
  %v536 = vunpack.c.l.b16 %v220
  %v537 = vunpack.c.h.b16 %v220
  %v538 = vunpack.c.l.b16 %v221
  %v539 = vunpack.c.l.b16 %v222
  %v540 = vunpack.c.h.b16 %v222
  %v541 = vunpack.c.l.b16 %v223
  %v542 = vunpack.c.h.b16 %v223
  %v543 = vunpack.c.l.b16 %v224
  %v544 = vunpack.c.h.b16 %v224
  %v545 = vunpack.c.l.b16 %v225
  %v546 = vunpack.c.l.b16 %v226
  %v547 = vunpack.c.h.b16 %v226
  %v548 = vunpack.c.l.b16 %v227
  %v549 = vunpack.c.h.b16 %v227
  %v550 = vunpack.c.l.b16 %v228
  %v551 = vunpack.c.h.b16 %v228
  %v552 = vunpack.c.l.b16 %v229
  %v553 = vunpack.c.l.b16 %v230
  %v554 = vunpack.c.h.b16 %v230
  %v555 = vunpack.c.l.b16 %v231
  %v556 = vunpack.c.h.b16 %v231
  %v557 = vunpack.c.l.b16 %v232
  %v558 = vunpack.c.h.b16 %v232
  %v559 = vunpack.c.l.b16 %v233
  %v560 = vunpack.c.l.b16 %v234
  %v561 = vunpack.c.h.b16 %v234
  %v562 = vunpack.c.l.b16 %v235
  %v563 = vunpack.c.h.b16 %v235
  %v564 = vunpack.c.l.b16 %v236
  %v565 = vunpack.c.h.b16 %v236
  %v566 = vunpack.c.l.b16 %v237
  %v567 = vunpack.c.l.b16 %v238
  %v568 = vunpack.c.h.b16 %v238
  %v569 = vunpack.c.l.b16 %v239
  %v570 = vunpack.c.h.b16 %v239
  %v571 = vunpack.c.l.b16 %v240
  %v572 = vunpack.c.h.b16 %v240
  %v573 = vunpack.c.l.b16 %v241
  %v574 = vunpack.c.l.b16 %v242
  %v575 = vunpack.c.h.b16 %v242
  %v576 = vunpack.c.l.b16 %v243
  %v577 = vunpack.c.h.b16 %v243
  %v578 = vunpack.c.l.b16 %v244
  %v579 = vunpack.c.h.b16 %v244
  %v580 = vunpack.c.l.b16 %v245
  %v581 = vunpack.c.l.b16 %v246
  %v582 = vunpack.c.h.b16 %v246
  %v583 = vunpack.c.l.b16 %v247
  %v584 = vunpack.c.h.b16 %v247
  %v585 = vunpack.c.l.b16 %v248
  %v586 = vunpack.c.h.b16 %v248
  %v587 = vunpack.c.l.b16 %v249
  %v588 = vunpack.c.l.b16 %v250
  %v589 = vunpack.c.h.b16 %v250
  %v590 = vunpack.c.l.b16 %v251
  %v591 = vunpack.c.h.b16 %v251
  %v592 = vunpack.c.l.b16 %v252
  %v593 = vunpack.c.h.b16 %v252
  %v594 = vunpack.c.l.b16 %v253
  %v595 = vunpack.c.l.b16 %v254
  %v596 = vunpack.c.h.b16 %v254
  %v597 = vunpack.c.l.b16 %v255
  %v598 = vunpack.c.h.b16 %v255
  %v599 = vunpack.c.l.b16 %v256
  %v600 = vunpack.c.h.b16 %v256
  %v601 = vunpack.c.l.b16 %v257
  %v602 = vunpack.c.l.b16 %v258
  %v603 = vunpack.c.h.b16 %v258
  %v604 = vunpack.c.l.b16 %v259
  %v605 = vunpack.c.h.b16 %v259
  %v606 = vunpack.c.l.b16 %v260
  %v607 = vunpack.c.h.b16 %v260
  %v608 = vunpack.c.l.b16 %v261
  %v609 = vunpack.c.l.b16 %v262
  %v610 = vunpack.c.h.b16 %v262
  %v611 = vunpack.c.l.b16 %v263
  %v612 = vunpack.c.h.b16 %v263
  %v613 = vunpack.c.l.b16 %v264
  %v614 = vunpack.c.h.b16 %v264
  %v615 = vunpack.c.l.b16 %v265
  %v616 = vunpack.c.l.b16 %v266
  %v617 = vunpack.c.h.b16 %v266
  %v618 = vunpack.c.l.b16 %v267
  %v619 = vunpack.c.h.b16 %v267
  %v620 = vunpack.c.l.b16 %v268
  %v621 = vunpack.c.h.b16 %v268
  %v622 = vunpack.c.l.b16 %v269
  %v623 = vunpack.c.l.b16 %v270
  %v624 = vunpack.c.h.b16 %v270
  %v625 = vunpack.c.l.b16 %v271
  %v626 = vunpack.c.h.b16 %v271
  %v627 = vunpack.c.l.b16 %v272
  %v628 = vunpack.c.h.b16 %v272
  %v629 = vunpack.c.l.b16 %v273
  %v630 = vunpack.c.l.b16 %v274
  %v631 = vunpack.c.h.b16 %v274
  %v632 = vunpack.c.l.b16 %v275
  %v633 = vunpack.c.h.b16 %v275
  %v634 = vunpack.c.l.b16 %v276
  %v635 = vunpack.c.h.b16 %v276
  %v636 = vunpack.c.l.b16 %v277
  %v637 = vunpack.c.l.b16 %v278
  %v638 = vunpack.c.h.b16 %v278
  %v639 = vunpack.c.l.b16 %v279
  %v640 = vunpack.c.h.b16 %v279
  %v641 = vunpack.c.l.b16 %v280
  %v642 = vunpack.c.h.b16 %v280
  %v643 = vunpack.c.l.b16 %v281
  %v644 = vunpack.c.l.b16 %v282
  %v645 = vunpack.c.h.b16 %v282
  %v646 = vunpack.c.l.b16 %v283
  %v647 = vunpack.c.h.b16 %v283
  %v648 = vunpack.c.l.b16 %v284
  %v649 = vunpack.c.h.b16 %v284
  %v650 = vunpack.c.l.b16 %v285
  %v651 = vunpack.c.l.b16 %v286
  %v652 = vunpack.c.h.b16 %v286
  %v653 = vunpack.c.l.b16 %v287
  %v654 = vunpack.c.h.b16 %v287
  %v655 = vunpack.c.l.b16 %v288
  %v656 = vunpack.c.h.b16 %v288
  %v657 = vunpack.c.l.b16 %v289
  %v658 = vpack.c.b16 %v441, %v434
  %v659 = vpack.c.b16 %v442, %v435
  %v660 = vpack.c.b16 %v443, %v436
  %v661 = vpack.c.b16 %v444, %v437
  %v662 = vpack.c.b16 %v445, %v438
  %v663 = vpack.c.b16 %v446, %v439
  %v664 = vpack.c.b16 %v447, %v440
  %v665 = vpack.c.b16 %v455, %v448
  %v666 = vpack.c.b16 %v456, %v449
  %v667 = vpack.c.b16 %v457, %v450
  %v668 = vpack.c.b16 %v458, %v451
  %v669 = vpack.c.b16 %v459, %v452
  %v670 = vpack.c.b16 %v460, %v453
  %v671 = vpack.c.b16 %v461, %v454
  %v672 = vpack.c.b16 %v469, %v462
  %v673 = vpack.c.b16 %v470, %v463
  %v674 = vpack.c.b16 %v471, %v464
  %v675 = vpack.c.b16 %v472, %v465
  %v676 = vpack.c.b16 %v473, %v466
  %v677 = vpack.c.b16 %v474, %v467
  %v678 = vpack.c.b16 %v475, %v468
  %v679 = vpack.c.b16 %v483, %v476
  %v680 = vpack.c.b16 %v484, %v477
  %v681 = vpack.c.b16 %v485, %v478
  %v682 = vpack.c.b16 %v486, %v479
  %v683 = vpack.c.b16 %v487, %v480
  %v684 = vpack.c.b16 %v488, %v481
  %v685 = vpack.c.b16 %v489, %v482
  %v686 = vpack.c.b16 %v497, %v490
  %v687 = vpack.c.b16 %v498, %v491
  %v688 = vpack.c.b16 %v499, %v492
  %v689 = vpack.c.b16 %v500, %v493
  %v690 = vpack.c.b16 %v501, %v494
  %v691 = vpack.c.b16 %v502, %v495
  %v692 = vpack.c.b16 %v503, %v496
  %v693 = vpack.c.b16 %v511, %v504
  %v694 = vpack.c.b16 %v512, %v505
  %v695 = vpack.c.b16 %v513, %v506
  %v696 = vpack.c.b16 %v514, %v507
  %v697 = vpack.c.b16 %v515, %v508
  %v698 = vpack.c.b16 %v516, %v509
  %v699 = vpack.c.b16 %v517, %v510
  %v700 = vpack.c.b16 %v525, %v518
  %v701 = vpack.c.b16 %v526, %v519
  %v702 = vpack.c.b16 %v527, %v520
  %v703 = vpack.c.b16 %v528, %v521
  %v704 = vpack.c.b16 %v529, %v522
  %v705 = vpack.c.b16 %v530, %v523
  %v706 = vpack.c.b16 %v531, %v524
  %v707 = vpack.c.b16 %v539, %v532
  %v708 = vpack.c.b16 %v540, %v533
  %v709 = vpack.c.b16 %v541, %v534
  %v710 = vpack.c.b16 %v542, %v535
  %v711 = vpack.c.b16 %v543, %v536
  %v712 = vpack.c.b16 %v544, %v537
  %v713 = vpack.c.b16 %v545, %v538
  %v714 = vpack.c.b16 %v553, %v546
  %v715 = vpack.c.b16 %v554, %v547
  %v716 = vpack.c.b16 %v555, %v548
  %v717 = vpack.c.b16 %v556, %v549
  %v718 = vpack.c.b16 %v557, %v550
  %v719 = vpack.c.b16 %v558, %v551
  %v720 = vpack.c.b16 %v559, %v552
  %v721 = vpack.c.b16 %v567, %v560
  %v722 = vpack.c.b16 %v568, %v561
  %v723 = vpack.c.b16 %v569, %v562
  %v724 = vpack.c.b16 %v570, %v563
  %v725 = vpack.c.b16 %v571, %v564
  %v726 = vpack.c.b16 %v572, %v565
  %v727 = vpack.c.b16 %v573, %v566
  %v728 = vpack.c.b16 %v581, %v574
  %v729 = vpack.c.b16 %v582, %v575
  %v730 = vpack.c.b16 %v583, %v576
  %v731 = vpack.c.b16 %v584, %v577
  %v732 = vpack.c.b16 %v585, %v578
  %v733 = vpack.c.b16 %v586, %v579
  %v734 = vpack.c.b16 %v587, %v580
  %v735 = vpack.c.b16 %v595, %v588
  %v736 = vpack.c.b16 %v596, %v589
  %v737 = vpack.c.b16 %v597, %v590
  %v738 = vpack.c.b16 %v598, %v591
  %v739 = vpack.c.b16 %v599, %v592
  %v740 = vpack.c.b16 %v600, %v593
  %v741 = vpack.c.b16 %v601, %v594
  %v742 = vpack.c.b16 %v609, %v602
  %v743 = vpack.c.b16 %v610, %v603
  %v744 = vpack.c.b16 %v611, %v604
  %v745 = vpack.c.b16 %v612, %v605
  %v746 = vpack.c.b16 %v613, %v606
  %v747 = vpack.c.b16 %v614, %v607
  %v748 = vpack.c.b16 %v615, %v608
  %v749 = vpack.c.b16 %v623, %v616
  %v750 = vpack.c.b16 %v624, %v617
  %v751 = vpack.c.b16 %v625, %v618
  %v752 = vpack.c.b16 %v626, %v619
  %v753 = vpack.c.b16 %v627, %v620
  %v754 = vpack.c.b16 %v628, %v621
  %v755 = vpack.c.b16 %v629, %v622
  %v756 = vpack.c.b16 %v637, %v630
  %v757 = vpack.c.b16 %v638, %v631
  %v758 = vpack.c.b16 %v639, %v632
  %v759 = vpack.c.b16 %v640, %v633
  %v760 = vpack.c.b16 %v641, %v634
  %v761 = vpack.c.b16 %v642, %v635
  %v762 = vpack.c.b16 %v643, %v636
  %v763 = vpack.c.b16 %v651, %v644
  %v764 = vpack.c.b16 %v652, %v645
  %v765 = vpack.c.b16 %v653, %v646
  %v766 = vpack.c.b16 %v654, %v647
  %v767 = vpack.c.b16 %v655, %v648
  %v768 = vpack.c.b16 %v656, %v649
  %v769 = vpack.c.b16 %v657, %v650
  %882 = vmatpush.bf16.msra.mxu0 %v707
  %883 = vmatpush.bf16.msra.mxu0 %v700
  %884 = vmatpush.bf16.msra.mxu0 %v693
  %885 = vmatpush.bf16.msra.mxu0 %v686
  %886 = vmatpush.bf16.msra.mxu0 %v679
  %887 = vmatpush.bf16.msra.mxu0 %v672
  %888 = vmatpush.bf16.msra.mxu0 %v665
  %889 = vmatpush.bf16.msra.mxu0 %v658
  %890 = vmatmul.bf16.gmra.mxu0 %v160
  %v891 = vpop.f32.mrf.mxu0
  %v892 = vadd.f32 %v292, %v891
  %v893 = vpop.f32.mrf.mxu0
  %894 = vdwg.mxu0
  %895 = vmatpush.bf16.msra.mxu0 %v763
  %896 = vmatpush.bf16.msra.mxu0 %v756
  %897 = vmatpush.bf16.msra.mxu0 %v749
  %898 = vmatpush.bf16.msra.mxu0 %v742
  %899 = vmatpush.bf16.msra.mxu0 %v735
  %900 = vmatpush.bf16.msra.mxu0 %v728
  %901 = vmatpush.bf16.msra.mxu0 %v721
  %902 = vmatpush.bf16.msra.mxu0 %v714
  %903 = vmatmul.bf16.gmra.mxu0 %v161
  %v904 = vpop.f32.mrf.mxu0
  %v905 = vadd.f32 %v892, %v904
  %v906 = vpop.f32.mrf.mxu0
  %907 = vdwg.mxu0
  %908 = vmatpush.bf16.msra.mxu0 %v708
  %909 = vmatpush.bf16.msra.mxu0 %v701
  %910 = vmatpush.bf16.msra.mxu0 %v694
  %911 = vmatpush.bf16.msra.mxu0 %v687
  %912 = vmatpush.bf16.msra.mxu0 %v680
  %913 = vmatpush.bf16.msra.mxu0 %v673
  %914 = vmatpush.bf16.msra.mxu0 %v666
  %915 = vmatpush.bf16.msra.mxu0 %v659
  %916 = vmatmul.bf16.gmra.mxu0 %v160
  %v917 = vpop.f32.mrf.mxu0
  %v918 = vadd.f32 %v293, %v917
  %v919 = vpop.f32.mrf.mxu0
  %920 = vdwg.mxu0
  %921 = vmatpush.bf16.msra.mxu0 %v764
  %922 = vmatpush.bf16.msra.mxu0 %v757
  %923 = vmatpush.bf16.msra.mxu0 %v750
  %924 = vmatpush.bf16.msra.mxu0 %v743
  %925 = vmatpush.bf16.msra.mxu0 %v736
  %926 = vmatpush.bf16.msra.mxu0 %v729
  %927 = vmatpush.bf16.msra.mxu0 %v722
  %928 = vmatpush.bf16.msra.mxu0 %v715
  %929 = vmatmul.bf16.gmra.mxu0 %v161
  %v930 = vpop.f32.mrf.mxu0
  %v931 = vadd.f32 %v918, %v930
  %v932 = vpop.f32.mrf.mxu0
  %933 = vdwg.mxu0
  %934 = vmatpush.bf16.msra.mxu0 %v709
  %935 = vmatpush.bf16.msra.mxu0 %v702
  %936 = vmatpush.bf16.msra.mxu0 %v695
  %937 = vmatpush.bf16.msra.mxu0 %v688
  %938 = vmatpush.bf16.msra.mxu0 %v681
  %939 = vmatpush.bf16.msra.mxu0 %v674
  %940 = vmatpush.bf16.msra.mxu0 %v667
  %941 = vmatpush.bf16.msra.mxu0 %v660
  %942 = vmatmul.bf16.gmra.mxu0 %v160
  %v943 = vpop.f32.mrf.mxu0
  %v944 = vadd.f32 %v294, %v943
  %v945 = vpop.f32.mrf.mxu0
  %946 = vdwg.mxu0
  %947 = vmatpush.bf16.msra.mxu0 %v765
  %948 = vmatpush.bf16.msra.mxu0 %v758
  %949 = vmatpush.bf16.msra.mxu0 %v751
  %950 = vmatpush.bf16.msra.mxu0 %v744
  %951 = vmatpush.bf16.msra.mxu0 %v737
  %952 = vmatpush.bf16.msra.mxu0 %v730
  %953 = vmatpush.bf16.msra.mxu0 %v723
  %954 = vmatpush.bf16.msra.mxu0 %v716
  %955 = vmatmul.bf16.gmra.mxu0 %v161
  %v956 = vpop.f32.mrf.mxu0
  %v957 = vadd.f32 %v944, %v956
  %v958 = vpop.f32.mrf.mxu0
  %959 = vdwg.mxu0
  %960 = vmatpush.bf16.msra.mxu0 %v710
  %961 = vmatpush.bf16.msra.mxu0 %v703
  %962 = vmatpush.bf16.msra.mxu0 %v696
  %963 = vmatpush.bf16.msra.mxu0 %v689
  %964 = vmatpush.bf16.msra.mxu0 %v682
  %965 = vmatpush.bf16.msra.mxu0 %v675
  %966 = vmatpush.bf16.msra.mxu0 %v668
  %967 = vmatpush.bf16.msra.mxu0 %v661
  %968 = vmatmul.bf16.gmra.mxu0 %v160
  %v969 = vpop.f32.mrf.mxu0
  %v970 = vadd.f32 %v295, %v969
  %v971 = vpop.f32.mrf.mxu0
  %972 = vdwg.mxu0
  %973 = vmatpush.bf16.msra.mxu0 %v766
  %974 = vmatpush.bf16.msra.mxu0 %v759
  %975 = vmatpush.bf16.msra.mxu0 %v752
  %976 = vmatpush.bf16.msra.mxu0 %v745
  %977 = vmatpush.bf16.msra.mxu0 %v738
  %978 = vmatpush.bf16.msra.mxu0 %v731
  %979 = vmatpush.bf16.msra.mxu0 %v724
  %980 = vmatpush.bf16.msra.mxu0 %v717
  %981 = vmatmul.bf16.gmra.mxu0 %v161
  %v982 = vpop.f32.mrf.mxu0
  %v983 = vadd.f32 %v970, %v982
  %v984 = vpop.f32.mrf.mxu0
  %985 = vdwg.mxu0
  %986 = vmatpush.bf16.msra.mxu0 %v711
  %987 = vmatpush.bf16.msra.mxu0 %v704
  %988 = vmatpush.bf16.msra.mxu0 %v697
  %989 = vmatpush.bf16.msra.mxu0 %v690
  %990 = vmatpush.bf16.msra.mxu0 %v683
  %991 = vmatpush.bf16.msra.mxu0 %v676
  %992 = vmatpush.bf16.msra.mxu0 %v669
  %993 = vmatpush.bf16.msra.mxu0 %v662
  %994 = vmatmul.bf16.gmra.mxu0 %v160
  %v995 = vpop.f32.mrf.mxu0
  %v996 = vadd.f32 %v296, %v995
  %v997 = vpop.f32.mrf.mxu0
  %998 = vdwg.mxu0
  %999 = vmatpush.bf16.msra.mxu0 %v767
  %1000 = vmatpush.bf16.msra.mxu0 %v760
  %1001 = vmatpush.bf16.msra.mxu0 %v753
  %1002 = vmatpush.bf16.msra.mxu0 %v746
  %1003 = vmatpush.bf16.msra.mxu0 %v739
  %1004 = vmatpush.bf16.msra.mxu0 %v732
  %1005 = vmatpush.bf16.msra.mxu0 %v725
  %1006 = vmatpush.bf16.msra.mxu0 %v718
  %1007 = vmatmul.bf16.gmra.mxu0 %v161
  %v1008 = vpop.f32.mrf.mxu0
  %v1009 = vadd.f32 %v996, %v1008
  %v1010 = vpop.f32.mrf.mxu0
  %1011 = vdwg.mxu0
  %1012 = vmatpush.bf16.msra.mxu0 %v712
  %1013 = vmatpush.bf16.msra.mxu0 %v705
  %1014 = vmatpush.bf16.msra.mxu0 %v698
  %1015 = vmatpush.bf16.msra.mxu0 %v691
  %1016 = vmatpush.bf16.msra.mxu0 %v684
  %1017 = vmatpush.bf16.msra.mxu0 %v677
  %1018 = vmatpush.bf16.msra.mxu0 %v670
  %1019 = vmatpush.bf16.msra.mxu0 %v663
  %1020 = vmatmul.bf16.gmra.mxu0 %v160
  %v1021 = vpop.f32.mrf.mxu0
  %v1022 = vadd.f32 %v297, %v1021
  %v1023 = vpop.f32.mrf.mxu0
  %1024 = vdwg.mxu0
  %1025 = vmatpush.bf16.msra.mxu0 %v768
  %1026 = vmatpush.bf16.msra.mxu0 %v761
  %1027 = vmatpush.bf16.msra.mxu0 %v754
  %1028 = vmatpush.bf16.msra.mxu0 %v747
  %1029 = vmatpush.bf16.msra.mxu0 %v740
  %1030 = vmatpush.bf16.msra.mxu0 %v733
  %1031 = vmatpush.bf16.msra.mxu0 %v726
  %1032 = vmatpush.bf16.msra.mxu0 %v719
  %1033 = vmatmul.bf16.gmra.mxu0 %v161
  %v1034 = vpop.f32.mrf.mxu0
  %v1035 = vadd.f32 %v1022, %v1034
  %v1036 = vpop.f32.mrf.mxu0
  %1037 = vdwg.mxu0
  %1038 = vmatpush.bf16.msra.mxu0 %v713
  %1039 = vmatpush.bf16.msra.mxu0 %v706
  %1040 = vmatpush.bf16.msra.mxu0 %v699
  %1041 = vmatpush.bf16.msra.mxu0 %v692
  %1042 = vmatpush.bf16.msra.mxu0 %v685
  %1043 = vmatpush.bf16.msra.mxu0 %v678
  %1044 = vmatpush.bf16.msra.mxu0 %v671
  %1045 = vmatpush.bf16.msra.mxu0 %v664
  %1046 = vmatmul.bf16.gmra.mxu0 %v160
  %v1047 = vpop.f32.mrf.mxu0
  %v1048 = vadd.f32 %v298, %v1047
  %v1049 = vpop.f32.mrf.mxu0
  %1050 = vdwg.mxu0
  %1051 = vmatpush.bf16.msra.mxu0 %v769
  %1052 = vmatpush.bf16.msra.mxu0 %v762
  %1053 = vmatpush.bf16.msra.mxu0 %v755
  %1054 = vmatpush.bf16.msra.mxu0 %v748
  %1055 = vmatpush.bf16.msra.mxu0 %v741
  %1056 = vmatpush.bf16.msra.mxu0 %v734
  %1057 = vmatpush.bf16.msra.mxu0 %v727
  %1058 = vmatpush.bf16.msra.mxu0 %v720
  %1059 = vmatmul.bf16.gmra.mxu0 %v161
  %v1060 = vpop.f32.mrf.mxu0
  %v1061 = vadd.f32 %v1048, %v1060
  %v1062 = vpop.f32.mrf.mxu0
  %1063 = vdwg.mxu0
  %v1064 = vtanh.pop %v905
  %v1065 = vtanh.pop %v931
  %v1066 = vtanh.pop %v957
  %v1067 = vtanh.pop %v983
  %v1068 = vtanh.pop %v1009
  %v1069 = vtanh.pop %v1035
  %v1070 = vtanh.pop %v1061
  %1071 = vst [vmem:[%s7] sm:$0xff] %v1064
  %1072 = vst [vmem:[%s7 + $0x8] sm:$0xff] %v1065
  %1073 = vst [vmem:[%s7 + $0x10] sm:$0xff] %v1066
  %1074 = vst [vmem:[%s7 + $0x18] sm:$0xff] %v1067
  %1075 = vst [vmem:[%s7 + $0x20] sm:$0xff] %v1068
  %1076 = vst [vmem:[%s7 + $0x28] sm:$0xff] %v1069
  %vm1077 = vcmask 130048
  %1078 = vst.msk [vmem:[%s7 + $0x30] sm:$0xff] %vm1077, %v1070
  // Predicated region
  $region30: #{basic_generator.1} parent=0 // pred_check
    _
  $region31: #{basic_generator.1} parent=0 // pred_check_branch
    %1080 = sbr.rel (0) target = $region33
  $region32: #{basic_generator.1} parent=0 // pred_region
    _
  $region33: #{basic_generator.1} parent=0 // pred_fallthru
    _
  // Predicated region
  $region34: #{basic_generator.1} parent=0 // pred_check
    _
  $region35: #{basic_generator.1} parent=0 // pred_check_branch
    %1082 = sbr.rel (0) target = $region37
  $region36: #{basic_generator.1} parent=0 // pred_region
    _
  $region37: #{basic_generator.1} parent=0 // pred_fallthru
    _

</llo_original>
